<compile_context>
chip_gen: v7x
topology: tpu7x:2x2x1
jax: 0.10.0
libtpu: 0.0.40
codegen_flags: <defaults>
</compile_context>

<pallas_src>
import jax
import jax.numpy as jnp
from jax.experimental import pallas as pl
from jax.experimental.pallas import tpu as pltpu


_SMALL_BYTES = 1 << 20           # below this, skip the kernel entirely
_TARGET_BLOCK_BYTES = 2 << 20    # per-block budget for the VMEM pipeline path
_MIN_DMA_CHUNK_BYTES = 1 << 20   # per-chunk floor for concurrent HBM->HBM DMAs


# ---------------------------------------------------------------------------
# Path A (primary): direct HBM -> HBM DMA copy, no VMEM round trip.
# ---------------------------------------------------------------------------
def _row_chunks(n, row_bytes):
    """Static (start, rows) chunks; up to 4 concurrent DMAs for large copies."""
    total = n * row_bytes
    n_chunks = 1
    for c in (4, 2):
        if total // c >= _MIN_DMA_CHUNK_BYTES and n >= 8 * c:
            n_chunks = c
            break
    chunks = []
    start = 0
    for c in range(n_chunks):
        rows = (n - start) // (n_chunks - c)
        if c < n_chunks - 1:
            rows -= rows % 8
        chunks.append((start, rows))
        start += rows
    return chunks


def _make_hbm_copy_kernel(chunks):
    def kernel(src_ref, dst_ref, sems):
        copies = []
        for idx, (start, rows) in enumerate(chunks):
            cp = pltpu.make_async_copy(
                src_ref.at[pl.ds(start, rows)],
                dst_ref.at[pl.ds(start, rows)],
                sems.at[idx],
            )
            cp.start()
            copies.append(cp)
        for cp in copies:
            cp.wait()
    return kernel


def materialize_hbm_dma(x: jax.Array) -> jax.Array:
    """Fresh output buffer via direct HBM->HBM async DMA (no VMEM round trip)."""
    n, m = x.shape
    itemsize = jnp.dtype(x.dtype).itemsize
    chunks = _row_chunks(n, m * itemsize)
    return pl.pallas_call(
        _make_hbm_copy_kernel(chunks),
        out_shape=jax.ShapeDtypeStruct((n, m), x.dtype),
        in_specs=[pl.BlockSpec(memory_space=pl.ANY)],
        out_specs=pl.BlockSpec(memory_space=pl.ANY),
        scratch_shapes=[pltpu.SemaphoreType.DMA((len(chunks),))],
        cost_estimate=pl.CostEstimate(
            flops=0, transcendentals=0, bytes_accessed=2 * n * m * itemsize),
    )(x)


# ---------------------------------------------------------------------------
# Path B (alternative): auto-pipelined VMEM copy with lane-dense row tiles.
# ---------------------------------------------------------------------------
def _identity_copy_kernel(s1_ref, o_ref):
    o_ref[...] = s1_ref[...]


def _row_tile(n, m, itemsize):
    """Lane-dense, row-contiguous tile: tn = full row width when it fits the
    ~2 MiB block budget, tm a multiple of 8 (or the full dim)."""
    row_bytes = m * itemsize
    if row_bytes <= _TARGET_BLOCK_BYTES:
        tn = m  # full rows: contiguous HBM DMA + unmasked vst
        rows = max(8, (_TARGET_BLOCK_BYTES // row_bytes) // 8 * 8)
        tm = n if n <= rows else int(rows)
    else:
        # Rows wider than the block budget: 8 sublanes, 128-aligned lane split.
        tm = n if n < 8 else 8
        lanes = max(128, (_TARGET_BLOCK_BYTES // (8 * itemsize)) // 128 * 128)
        tn = m if m <= lanes else int(lanes)
    return tm, tn


def materialize_pipeline(x: jax.Array) -> jax.Array:
    n, m = x.shape
    itemsize = jnp.dtype(x.dtype).itemsize
    tm, tn = _row_tile(n, m, itemsize)
    grid = (pl.cdiv(n, tm), pl.cdiv(m, tn))
    return pl.pallas_call(
        _identity_copy_kernel,
        out_shape=jax.ShapeDtypeStruct((n, m), x.dtype),
        grid=grid,
        in_specs=[pl.BlockSpec((tm, tn), lambda i, j: (i, j))],
        out_specs=pl.BlockSpec((tm, tn), lambda i, j: (i, j)),
        compiler_params=pltpu.CompilerParams(
            # Independent tiles: shard across v7x's 2 TensorCores (no effect
            # on single-TC v5e/v6e).
            dimension_semantics=("parallel", "parallel")),
        cost_estimate=pl.CostEstimate(
            flops=0, transcendentals=0, bytes_accessed=2 * n * m * itemsize),
    )(x)


# ---------------------------------------------------------------------------
# Module wrapper (mirror of the nn.Module).
# ---------------------------------------------------------------------------
def estimate_s1_materialize(estimated_S1: jax.Array, method: str = "auto") -> jax.Array:
    nbytes = estimated_S1.size * jnp.dtype(estimated_S1.dtype).itemsize
    if method == "auto":
        if nbytes <= _SMALL_BYTES:
            # Kernel launch would be pure overhead; identity semantics allow
            # returning the (immutable) parameter itself.
            return estimated_S1
        method = "dma"
    if method == "dma":
        return materialize_hbm_dma(estimated_S1)
    if method == "pipeline":
        return materialize_pipeline(estimated_S1)
    raise ValueError(f"unknown method: {method}")


def make_estimate_s1(S1: jax.Array):
    """Capture the parameter (float32 copy of S1) and return forward()."""
    estimated_S1 = jnp.asarray(S1, dtype=jnp.float32)

    def forward(materialize: bool = False) -> jax.Array:
        if materialize:
            return estimate_s1_materialize(estimated_S1)
        # Identity forward: the faithful, zero-cost equivalent of
        # `return self.estimated_S1`.
        return estimated_S1

    return forward, estimated_S1


if __name__ == "__main__":
    key = jax.random.PRNGKey(0)

    # Small parameter consistent with the module (n=8, m=32).
    S1 = jax.random.normal(key, (8, 32), dtype=jnp.float32)
    forward, param = make_estimate_s1(S1)

    # Default forward: returns the parameter unchanged.
    out = forward()
    assert out.shape == (8, 32) and out.dtype == jnp.float32
    assert bool(jnp.array_equal(out, param))

    # Materialize path at tiny size takes the early-exit (no kernel launch).
    out_small = jax.block_until_ready(forward(materialize=True))
    assert bool(jnp.array_equal(out_small, param))

    # Exercise the HBM->HBM DMA kernel directly on the small parameter.
    out_dma = jax.block_until_ready(materialize_hbm_dma(param))
    assert out_dma.shape == (8, 32) and out_dma.dtype == jnp.float32
    assert bool(jnp.array_equal(out_dma, param))

    # Larger parameter (4 MiB): auto path uses the multi-chunk HBM->HBM DMA
    # kernel; also validate the lane-dense pipelined copy (2x1 grid of
    # (512, 1024) full-row blocks).
    key2 = jax.random.PRNGKey(1)
    S1_big = jax.random.normal(key2, (1024, 1024), dtype=jnp.float32)
    fwd_big, param_big = make_estimate_s1(S1_big)

    out_big = jax.block_until_ready(fwd_big(materialize=True))
    assert bool(jnp.array_equal(out_big, param_big))

    out_pipe = jax.block_until_ready(materialize_pipeline(param_big))
    assert bool(jnp.array_equal(out_pipe, param_big))

    print("KERNEL_OK")
</pallas_src>

<mosaic_0001>
module attributes {stable_mosaic.version = 11 : i64} {
  func.func @kernel(%arg0: memref<8x32xf32, #tpu.memory_space<any>>, %arg1: memref<8x32xf32, #tpu.memory_space<any>>, %arg2: memref<1x!tpu.dma_semaphore, #tpu.memory_space<semaphore_mem>>) attributes {dimension_semantics = [], scalar_prefetch = 0 : i64, scratch_operands = 1 : i64, tpu.core_type = #tpu.core_type<tc>} {
    %c0_i32 = arith.constant 0 : i32
    %c0_i32_0 = arith.constant 0 : i32
    %c0_i32_1 = arith.constant 0 : i32
    %0 = tpu.memref_slice %arg0[%c0_i32_0, %c0_i32_1] : memref<8x32xf32, #tpu.memory_space<any>> -> memref<8x32xf32, #tpu.memory_space<any>>
    %c0_i32_2 = arith.constant 0 : i32
    %c0_i32_3 = arith.constant 0 : i32
    %1 = tpu.memref_slice %arg1[%c0_i32_2, %c0_i32_3] : memref<8x32xf32, #tpu.memory_space<any>> -> memref<8x32xf32, #tpu.memory_space<any>>
    %2 = tpu.memref_slice %arg2[%c0_i32] : memref<1x!tpu.dma_semaphore, #tpu.memory_space<semaphore_mem>> -> memref<1x!tpu.dma_semaphore, #tpu.memory_space<semaphore_mem>>
    %3 = tpu.memref_squeeze %2 : memref<1x!tpu.dma_semaphore, #tpu.memory_space<semaphore_mem>> -> memref<!tpu.dma_semaphore, #tpu.memory_space<semaphore_mem>>
    tpu.enqueue_dma source(%0 : memref<8x32xf32, #tpu.memory_space<any>>) target(%1 : memref<8x32xf32, #tpu.memory_space<any>>) target_semaphore(%3 : memref<!tpu.dma_semaphore, #tpu.memory_space<semaphore_mem>>)
    %c0_i32_4 = arith.constant 0 : i32
    %c0_i32_5 = arith.constant 0 : i32
    %c0_i32_6 = arith.constant 0 : i32
    %4 = tpu.memref_slice %arg0[%c0_i32_5, %c0_i32_6] : memref<8x32xf32, #tpu.memory_space<any>> -> memref<8x32xf32, #tpu.memory_space<any>>
    %c0_i32_7 = arith.constant 0 : i32
    %c0_i32_8 = arith.constant 0 : i32
    %5 = tpu.memref_slice %arg1[%c0_i32_7, %c0_i32_8] : memref<8x32xf32, #tpu.memory_space<any>> -> memref<8x32xf32, #tpu.memory_space<any>>
    %6 = tpu.memref_slice %arg2[%c0_i32_4] : memref<1x!tpu.dma_semaphore, #tpu.memory_space<semaphore_mem>> -> memref<1x!tpu.dma_semaphore, #tpu.memory_space<semaphore_mem>>
    %7 = tpu.memref_squeeze %6 : memref<1x!tpu.dma_semaphore, #tpu.memory_space<semaphore_mem>> -> memref<!tpu.dma_semaphore, #tpu.memory_space<semaphore_mem>>
    tpu.wait_dma2 semaphore(%7 : memref<!tpu.dma_semaphore, #tpu.memory_space<semaphore_mem>>) src(%4 : memref<8x32xf32, #tpu.memory_space<any>>) dst(%5 : memref<8x32xf32, #tpu.memory_space<any>>)
    return
  }
}

</mosaic_0001>

<llo_original>
// kernel: tpu_custom_call.1
$region0: #{tpu_custom_call.1}
  #allocation0 [shape = 'u32[]', space=smem, size = 0x4, offset = 0x4, fixed_abs, tag = 'smem constant byte address 0x4 - core index']
  #allocation1 [shape = 'u32[144,128]{1,0:T(1,128)}', space=vmem, size = 0x12000, scoped, tag = 'internal scratch']
  #allocation2 [shape = 's32[1]{0}', space=sflag, size = 0x4, scoped, tag = 'scratch operand']
  #allocation3 [shape = 's32[]', space=sflag, size = 0x4, offset = 0, fixed_abs, tag = 'sflag constant byte address 0x0 - dummy sync flag']
  #allocation4 [shape = 'u32[0]{0}', space=smem, size = 0, offset = 0, fixed_abs, tag = 'smem constant byte address 0x0 - null']
  %s0 = inlined_call_operand.hbm [shape: f32[8,32], index: 0, kind: input, shape index: {}]
  %s1 = inlined_call_operand.hbm [shape: f32[8,32], index: 1, kind: output, shape index: {}]
  %s2 = sld [smem:[#allocation0]]
  $region2: #{tpu_custom_call.1} parent=0
    _
  %s4 = ssub.s32 1, %s2
  %s5 = scalar_select 0, %s4, %s2
  %s7 = sshll.u32 1, 14
  %s8 = sxor.u32 4294967295, %s7
  %s11 = sshll.u32 3, 24
  %s12 = sxor.u32 4294967295, %s11
  %s13 = sand.u32 0, %s12
  %s15 = sor.u32 %s13, 0
  %18 = dma.general %s0, 128, %s1, [#allocation2], [#allocation3], [#allocation4], %s15, 0
  %s19 = smul.u32 8, 1
  %s20 = sshll.u32 %s19, 4
  %21 = dma.done [#allocation2], %s20
  %22 = vsyncmov [#allocation2]
  %s23 = vpop.sfrf %22
  %p24 = scmp.eq.s32.totalorder %s23, 0
  %p25 = pneg %p24
  %27 = shalt.err (%p25)

</llo_original>
